<compile_context>
chip_gen: v7x
topology: tpu7x:2x2x1
jax: 0.10.0
libtpu: 0.0.40
codegen_flags: <defaults>
</compile_context>

<pallas_src>
import functools

import jax
import jax.numpy as jnp
from jax import lax
from jax.experimental import pallas as pl
from jax.experimental.pallas import tpu as pltpu

_MiB = 1024 * 1024


def _round_up(x, m):
    return (x + m - 1) // m * m


def _vmem_capacity_bytes():
    cap = 64 * _MiB                       # v7x-safe fallback if the query fails
    try:
        info = pltpu.get_tpu_info()
        cap = int(getattr(info, "vmem_capacity_bytes", cap)) or cap
    except Exception:
        pass
    return cap


def _choose_tiles(n1, n2, d, in_itemsize, out_itemsize, budget_bytes,
                  tile_cap=None, k_tile_cap=None):
    """Pick (tm, tn, tk, d_pad) and estimate the per-step VMEM footprint."""
    cap_tm, cap_tn = 2048, 512            # bias toward a large tm (x2 reuse)
    if tile_cap is not None:
        c = max(128, _round_up(int(tile_cap), 128))
        cap_tm, cap_tn = min(cap_tm, c), min(cap_tn, c)

    tm = min(_round_up(max(int(n1), 1), 128), cap_tm)
    tn = min(_round_up(max(int(n2), 1), 128), cap_tn)

    d_pad = _round_up(max(int(d), 1), 128)

    # ---- contraction (D) tiling: only when the full-D operand tiles would
    #      force tm/tn down (mostly a v7x / very-large-D concern). ----
    tk = d_pad
    if k_tile_cap is not None:
        tk = min(tk, max(128, _round_up(int(k_tile_cap), 128)))
        d_pad = _round_up(d_pad, tk)
    elif d_pad > 256 and 2 * (tm + tn) * d_pad * in_itemsize > budget_bytes // 2:
        for cand in (1024, 768, 512, 384, 256, 128):
            if d_pad % cand == 0 and 2 * (tm + tn) * cand * in_itemsize <= budget_bytes // 2:
                tk = cand
                break
        else:
            tk = 128

    def footprint(tm_, tn_, tk_):
        k_tiled = tk_ < d_pad
        fp = 2 * (tm_ + tn_) * tk_ * in_itemsize   # double-buffered operand tiles
        fp += 2 * tm_ * tn_ * out_itemsize         # double-buffered output tile
        fp += 2 * (tm_ * 128 + 8 * tn_) * 4        # double-buffered norm tiles (layout-padded)
        fp += 3 * tm_ * tn_ * 4                    # f32 dots + epilogue temporaries
        if k_tiled:
            fp += tm_ * tn_ * 4                    # f32 accumulator scratch
        return fp

    # Shrink tn first (tm is the only tiling lever against x2 HBM re-streaming).
    while footprint(tm, tn, tk) > budget_bytes and (tm > 128 or tn > 128):
        if tn > 128:
            tn = max(128, (tn // 2) // 128 * 128)
        else:
            tm = max(128, (tm // 2) // 128 * 128)

    return tm, tn, tk, d_pad, footprint(tm, tn, tk)


def _epilogue(dots, a_aux, b_aux, distance, invert):
    if distance == "euclidean":
        # ||a-b||^2 = ||a||^2 + ||b||^2 - 2<a,b>   (torch.cdist p=2, mm path)
        return jnp.sqrt(jnp.maximum(a_aux + b_aux - 2.0 * dots, 0.0))
    # cosine: a_aux = 1/max(||a||, eps), b_aux = 1/max(||b||, eps)  (precomputed)
    out = dots * a_aux * b_aux
    if invert:
        out = 1.0 - out
    return out


_NT_DIMS = (((1,), (1,)), ((), ()))      # contract last dims: (tm,K) x (tn,K) -> (tm,tn)


def _sim_kernel(x1_ref, x2_ref, an_ref, bn_ref, o_ref, *, distance, invert):
    # x1_ref: (1, tm, D)  x2_ref: (1, tn, D)  an_ref: (1, tm, 1)  bn_ref: (1, 1, tn)
    dots = lax.dot_general(x1_ref[0], x2_ref[0], dimension_numbers=_NT_DIMS,
                           preferred_element_type=jnp.float32)
    o_ref[0] = _epilogue(dots, an_ref[0], bn_ref[0], distance, invert).astype(o_ref.dtype)


def _sim_kernel_ktiled(x1_ref, x2_ref, an_ref, bn_ref, o_ref, acc_ref, *,
                       distance, invert):
    # Same as above, but with a D-reduction grid axis (innermost, "arbitrary")
    # and an f32 accumulator in VMEM scratch.
    k = pl.program_id(3)

    @pl.when(k == 0)
    def _():
        acc_ref[...] = jnp.zeros_like(acc_ref)

    acc_ref[...] += lax.dot_general(x1_ref[0], x2_ref[0], dimension_numbers=_NT_DIMS,
                                    preferred_element_type=jnp.float32)

    @pl.when(k == pl.num_programs(3) - 1)
    def _():
        o_ref[0] = _epilogue(acc_ref[...], an_ref[0], bn_ref[0],
                             distance, invert).astype(o_ref.dtype)


def similarity_matrix_pallas(x1, x2, distance, invert=False, *,
                             tile_cap=None, k_tile_cap=None):
    """Pallas equivalent of models/similarity.py::similarity_matrix."""
    distance = distance.lower()
    if distance not in ("euclidean", "cosine"):
        raise ValueError(f"unsupported distance: {distance}")

    x1 = jnp.asarray(x1)
    x2 = jnp.asarray(x2)
    if x1.ndim == 2:
        x1 = x1[None]
    if x2.ndim == 2:
        x2 = x2[None]
    assert x1.ndim == 3 and x2.ndim == 3
    assert x1.shape[0] == x2.shape[0] and x1.shape[-1] == x2.shape[-1]

    B, N1, D = x1.shape
    _, N2, _ = x2.shape

    comp_dtype = jnp.result_type(x1.dtype, x2.dtype)
    if not jnp.issubdtype(comp_dtype, jnp.floating):
        comp_dtype = jnp.float32
    x1 = x1.astype(comp_dtype)
    x2 = x2.astype(comp_dtype)
    itemsize = int(jnp.dtype(comp_dtype).itemsize)

    # Generation-aware VMEM budget: ~half of physical for tiles, cap the
    # scoped limit at 3/4 of physical so Mosaic keeps internal headroom.
    vmem_cap = _vmem_capacity_bytes()
    budget = max(24 * _MiB, vmem_cap // 2 - 8 * _MiB)

    tm, tn, tk, d_pad, step_bytes = _choose_tiles(
        N1, N2, D, itemsize, itemsize, budget, tile_cap, k_tile_cap)

    n1_pad = _round_up(N1, tm)
    n2_pad = _round_up(N2, tn)

    # v7x has 2 TensorCores: guarantee >= 2 parallel grid tiles when possible.
    if B == 1 and n1_pad == tm and n2_pad == tn:
        if tm >= 256:
            tm = max(128, (tm // 2) // 128 * 128)
            n1_pad = _round_up(N1, tm)
        elif tn >= 256:
            tn = max(128, (tn // 2) // 128 * 128)
            n2_pad = _round_up(N2, tn)

    kt = d_pad // tk

    x1p = jnp.pad(x1, ((0, 0), (0, n1_pad - N1), (0, d_pad - D)))
    x2p = jnp.pad(x2, ((0, 0), (0, n2_pad - N2), (0, d_pad - D)))

    # Hoisted norms (XLA fuses these reductions with the pad pass); tiny side
    # inputs instead of a per-inner-step in-kernel upcast + reduction.
    a32 = x1p.astype(jnp.float32)
    b32 = x2p.astype(jnp.float32)
    a_sq = jnp.sum(a32 * a32, axis=-1, keepdims=True)        # (B, n1_pad, 1)
    b_sq = jnp.sum(b32 * b32, axis=-1)[:, None, :]           # (B, 1, n2_pad)
    if distance == "euclidean":
        a_aux, b_aux = a_sq, b_sq
    else:
        eps = jnp.float32(1e-8)                               # torch CosineSimilarity eps
        a_aux = 1.0 / jnp.maximum(jnp.sqrt(a_sq), eps)
        b_aux = 1.0 / jnp.maximum(jnp.sqrt(b_sq), eps)

    vmem_limit = int(min(max(32 * _MiB, step_bytes + 8 * _MiB), (vmem_cap * 3) // 4))

    flops = 2 * B * n1_pad * n2_pad * d_pad
    bytes_accessed = (B * n1_pad * d_pad * itemsize                    # x1 once per i-tile
                      + B * (n1_pad // tm) * n2_pad * d_pad * itemsize  # x2 re-streamed
                      + B * n1_pad * n2_pad * itemsize)                 # output writeback
    cost = pl.CostEstimate(
        flops=int(flops),
        transcendentals=int(B * n1_pad * n2_pad) if distance == "euclidean" else 0,
        bytes_accessed=int(bytes_accessed))

    if kt == 1:
        kernel = functools.partial(_sim_kernel, distance=distance, invert=invert)
        grid = (B, n1_pad // tm, n2_pad // tn)
        in_specs = [
            pl.BlockSpec((1, tm, d_pad), lambda b, i, j: (b, i, 0)),   # x1 (resident over j)
            pl.BlockSpec((1, tn, d_pad), lambda b, i, j: (b, j, 0)),   # x2 (streams over j)
            pl.BlockSpec((1, tm, 1), lambda b, i, j: (b, i, 0)),       # hoisted x1 norms
            pl.BlockSpec((1, 1, tn), lambda b, i, j: (b, 0, j)),       # hoisted x2 norms
        ]
        out_spec = pl.BlockSpec((1, tm, tn), lambda b, i, j: (b, i, j))
        scratch = []
        dims = ("parallel", "parallel", "parallel")   # no carried state anymore
    else:
        kernel = functools.partial(_sim_kernel_ktiled, distance=distance, invert=invert)
        grid = (B, n1_pad // tm, n2_pad // tn, kt)
        in_specs = [
            pl.BlockSpec((1, tm, tk), lambda b, i, j, k: (b, i, k)),
            pl.BlockSpec((1, tn, tk), lambda b, i, j, k: (b, j, k)),
            pl.BlockSpec((1, tm, 1), lambda b, i, j, k: (b, i, 0)),
            pl.BlockSpec((1, 1, tn), lambda b, i, j, k: (b, 0, j)),
        ]
        out_spec = pl.BlockSpec((1, tm, tn), lambda b, i, j, k: (b, i, j))
        scratch = [pltpu.VMEM((tm, tn), jnp.float32)]
        dims = ("parallel", "parallel", "parallel", "arbitrary")

    out = pl.pallas_call(
        kernel,
        out_shape=jax.ShapeDtypeStruct((B, n1_pad, n2_pad), comp_dtype),
        grid_spec=pltpu.PrefetchScalarGridSpec(
            num_scalar_prefetch=0,
            grid=grid,
            in_specs=in_specs,
            out_specs=out_spec,
            scratch_shapes=scratch),
        compiler_params=pltpu.CompilerParams(
            dimension_semantics=dims,
            vmem_limit_bytes=vmem_limit),
        cost_estimate=cost,
    )(x1p, x2p, a_aux, b_aux)

    return out[:, :N1, :N2]


class SimilarityMatrix:
    """Mirror of the torch.nn.Module (no parameters)."""

    def __init__(self, distance: str = "", invert: bool = False):
        self.distance = distance
        self.invert = invert

    def __call__(self, x1, x2):
        return similarity_matrix_pallas(x1, x2, self.distance, self.invert)


def _reference(x1, x2, distance, invert=False):
    # pure-JAX reference for correctness checking
    x1 = jnp.asarray(x1, jnp.float32)
    x2 = jnp.asarray(x2, jnp.float32)
    if x1.ndim == 2:
        x1 = x1[None]
    if x2.ndim == 2:
        x2 = x2[None]
    if distance.lower() == "euclidean":
        diff = x1[:, :, None, :] - x2[:, None, :, :]
        return jnp.sqrt(jnp.sum(diff * diff, axis=-1))
    dots = jnp.einsum("bnd,bmd->bnm", x1, x2)
    n1 = jnp.maximum(jnp.linalg.norm(x1, axis=-1), 1e-8)[:, :, None]
    n2 = jnp.maximum(jnp.linalg.norm(x2, axis=-1), 1e-8)[:, None, :]
    sim = dots / (n1 * n2)
    return 1.0 - sim if invert else sim


if __name__ == "__main__":
    key = jax.random.PRNGKey(0)
    k1, k2, k3, k4, k5, k6 = jax.random.split(key, 6)

    ok = True

    # 1) Small batched case (single tile per batch step, default tiling).
    B, N1, N2, D = 2, 8, 16, 32
    x1 = jax.random.normal(k1, (B, N1, D), dtype=jnp.float32)
    x2 = jax.random.normal(k2, (B, N2, D), dtype=jnp.float32)

    euc = SimilarityMatrix(distance="euclidean")
    out_e = jax.block_until_ready(euc(x1, x2))
    ok &= out_e.shape == (B, N1, N2)
    ok &= bool(jnp.allclose(out_e, _reference(x1, x2, "euclidean"),
                            atol=1e-4, rtol=1e-4))

    cos = SimilarityMatrix(distance="cosine", invert=True)
    out_c = jax.block_until_ready(cos(x1, x2))
    ok &= out_c.shape == (B, N1, N2)
    ok &= bool(jnp.allclose(out_c, _reference(x1, x2, "cosine", True),
                            atol=1e-4, rtol=1e-4))

    # 2) 2-D inputs + multi-tile (i, j) grid (padding + hoisted norm tiles).
    M1, M2, Dm = 136, 272, 40
    y1 = jax.random.normal(k3, (M1, Dm), dtype=jnp.float32)
    y2 = jax.random.normal(k4, (M2, Dm), dtype=jnp.float32)

    out_e2 = jax.block_until_ready(
        similarity_matrix_pallas(y1, y2, "euclidean", tile_cap=128))
    ok &= out_e2.shape == (1, M1, M2)
    ok &= bool(jnp.allclose(out_e2, _reference(y1, y2, "euclidean"),
                            atol=2e-3, rtol=2e-3))

    out_c2 = jax.block_until_ready(
        similarity_matrix_pallas(y1, y2, "cosine", invert=False, tile_cap=128))
    ok &= out_c2.shape == (1, M1, M2)
    ok &= bool(jnp.allclose(out_c2, _reference(y1, y2, "cosine", False),
                            atol=1e-4, rtol=1e-4))

    # 3) D-reduction (K-tiled) path: accumulator scratch + pl.when init/finalize.
    P1, P2, Dk = 136, 200, 300
    z1 = jax.random.normal(k5, (P1, Dk), dtype=jnp.float32)
    z2 = jax.random.normal(k6, (P2, Dk), dtype=jnp.float32)

    out_e3 = jax.block_until_ready(
        similarity_matrix_pallas(z1, z2, "euclidean", tile_cap=128, k_tile_cap=128))
    ok &= out_e3.shape == (1, P1, P2)
    ok &= bool(jnp.allclose(out_e3, _reference(z1, z2, "euclidean"),
                            atol=3e-3, rtol=3e-3))

    out_c3 = jax.block_until_ready(
        similarity_matrix_pallas(z1, z2, "cosine", invert=True,
                                 tile_cap=128, k_tile_cap=128))
    ok &= out_c3.shape == (1, P1, P2)
    ok &= bool(jnp.allclose(out_c3, _reference(z1, z2, "cosine", True),
                            atol=2e-4, rtol=2e-4))

    print("KERNEL_OK" if ok else "MISMATCH")
</pallas_src>

<mosaic_0001>
module attributes {stable_mosaic.version = 11 : i64} {
  func.func @_sim_kernel(%arg0: i32, %arg1: i32, %arg2: i32, %arg3: memref<1x128x128xf32, #tpu.memory_space<vmem>>, %arg4: memref<1x128x128xf32, #tpu.memory_space<vmem>>, %arg5: memref<1x128x1xf32, #tpu.memory_space<vmem>>, %arg6: memref<1x1x128xf32, #tpu.memory_space<vmem>>, %arg7: memref<1x128x128xf32, #tpu.memory_space<vmem>>) attributes {dimension_semantics = [#tpu.dimension_semantics<parallel>, #tpu.dimension_semantics<parallel>, #tpu.dimension_semantics<parallel>], iteration_bounds = array<i64: 2, 1, 1>, scalar_prefetch = 0 : i64, scratch_operands = 0 : i64, tpu.core_type = #tpu.core_type<tc>, window_params = [{transform_indices = @transform_0, window_bounds = array<i64: 1, 128, 128>}, {transform_indices = @transform_1, window_bounds = array<i64: 1, 128, 128>}, {transform_indices = @transform_2, window_bounds = array<i64: 1, 128, 1>}, {transform_indices = @transform_3, window_bounds = array<i64: 1, 1, 128>}, {transform_indices = @transform_4, window_bounds = array<i64: 1, 128, 128>}]} {
    %c0 = arith.constant 0 : index
    %c0_0 = arith.constant 0 : index
    %c0_1 = arith.constant 0 : index
    %0 = vector.load %arg3[%c0, %c0_0, %c0_1] : memref<1x128x128xf32, #tpu.memory_space<vmem>>, vector<1x128x128xf32>
    %1 = vector.shape_cast %0 : vector<1x128x128xf32> to vector<128x128xf32>
    %c0_2 = arith.constant 0 : index
    %c0_3 = arith.constant 0 : index
    %c0_4 = arith.constant 0 : index
    %2 = vector.load %arg4[%c0_2, %c0_3, %c0_4] : memref<1x128x128xf32, #tpu.memory_space<vmem>>, vector<1x128x128xf32>
    %3 = vector.shape_cast %2 : vector<1x128x128xf32> to vector<128x128xf32>
    %cst = arith.constant dense<0.000000e+00> : vector<128x128xf32>
    %4 = tpu.matmul %1, %3, %cst {dimension_numbers = #tpu.dot_dimension_numbers<[1], [1], [0], [0], [0, 0, 1, 0], [], []>} : vector<128x128xf32>, vector<128x128xf32>, vector<128x128xf32> -> vector<128x128xf32>
    %c0_5 = arith.constant 0 : index
    %c0_6 = arith.constant 0 : index
    %c0_7 = arith.constant 0 : index
    %5 = vector.load %arg5[%c0_5, %c0_6, %c0_7] : memref<1x128x1xf32, #tpu.memory_space<vmem>>, vector<1x128x1xf32>
    %6 = vector.shape_cast %5 : vector<1x128x1xf32> to vector<128x1xf32>
    %c0_8 = arith.constant 0 : index
    %c0_9 = arith.constant 0 : index
    %c0_10 = arith.constant 0 : index
    %7 = vector.load %arg6[%c0_8, %c0_9, %c0_10] : memref<1x1x128xf32, #tpu.memory_space<vmem>>, vector<1x1x128xf32>
    %8 = vector.shape_cast %7 : vector<1x1x128xf32> to vector<1x128xf32>
    %9 = vector.broadcast %6 : vector<128x1xf32> to vector<128x128xf32>
    %10 = vector.broadcast %8 : vector<1x128xf32> to vector<128x128xf32>
    %11 = arith.addf %9, %10 : vector<128x128xf32>
    %cst_11 = arith.constant 2.000000e+00 : f32
    %12 = vector.broadcast %cst_11 : f32 to vector<128x128xf32>
    %13 = arith.mulf %12, %4 : vector<128x128xf32>
    %14 = arith.subf %11, %13 : vector<128x128xf32>
    %cst_12 = arith.constant 0.000000e+00 : f32
    %15 = vector.broadcast %cst_12 : f32 to vector<128x128xf32>
    %16 = arith.maximumf %14, %15 : vector<128x128xf32>
    %17 = math.sqrt %16 : vector<128x128xf32>
    %c0_13 = arith.constant 0 : index
    %c0_14 = arith.constant 0 : index
    %c0_15 = arith.constant 0 : index
    %18 = vector.load %arg7[%c0_13, %c0_14, %c0_15] : memref<1x128x128xf32, #tpu.memory_space<vmem>>, vector<1x128x128xf32>
    %19 = vector.shape_cast %18 : vector<1x128x128xf32> to vector<128x128xf32>
    %20 = vector.shape_cast %17 : vector<128x128xf32> to vector<1x128x128xf32>
    tpu.vector_store %arg7[%c0_13, %c0_14, %c0_15], %20 {strides = array<i32>} : memref<1x128x128xf32, #tpu.memory_space<vmem>>, vector<1x128x128xf32>,
    return
  }
  func.func @transform_0(%arg0: i32, %arg1: i32, %arg2: i32) -> (i32, i32, i32) {
    %c0_i32 = arith.constant 0 : i32
    %c0_i32_0 = arith.constant 0 : i32
    return %arg0, %arg1, %c0_i32 : i32, i32, i32
  }
  func.func @transform_1(%arg0: i32, %arg1: i32, %arg2: i32) -> (i32, i32, i32) {
    %c0_i32 = arith.constant 0 : i32
    %c0_i32_0 = arith.constant 0 : i32
    return %arg0, %arg2, %c0_i32 : i32, i32, i32
  }
  func.func @transform_2(%arg0: i32, %arg1: i32, %arg2: i32) -> (i32, i32, i32) {
    %c0_i32 = arith.constant 0 : i32
    %c0_i32_0 = arith.constant 0 : i32
    return %arg0, %arg1, %c0_i32 : i32, i32, i32
  }
  func.func @transform_3(%arg0: i32, %arg1: i32, %arg2: i32) -> (i32, i32, i32) {
    %c0_i32 = arith.constant 0 : i32
    %c0_i32_0 = arith.constant 0 : i32
    return %arg0, %c0_i32, %arg2 : i32, i32, i32
  }
  func.func @transform_4(%arg0: i32, %arg1: i32, %arg2: i32) -> (i32, i32, i32) {
    %c0_i32 = arith.constant 0 : i32
    return %arg0, %arg1, %arg2 : i32, i32, i32
  }
}

</mosaic_0001>

<llo_original>
// kernel: tpu_custom_call.1
$region0: #{tpu_custom_call.1}
  #allocation0 [shape = 'u32[]', space=smem, size = 0x4, offset = 0x4, fixed_abs, tag = 'smem constant byte address 0x4 - core index']
  #allocation1 [shape = 'u32[144,128]{1,0:T(1,128)}', space=vmem, size = 0x12000, scoped, tag = 'internal scratch']
  %s0 = inlined_call_operand.vmem [shape: f32[2,128,128], index: 0, kind: input, shape index: {}]
  %s1 = inlined_call_operand.hbm [shape: f32[2,128,128], index: 1, kind: input, shape index: {}]
  %s2 = inlined_call_operand.vmem [shape: f32[2,128,1], index: 2, kind: input, shape index: {}]
  %s3 = inlined_call_operand.vmem [shape: f32[2,1,128], index: 3, kind: input, shape index: {}]
  %s4 = inlined_call_operand.hbm [shape: f32[2,128,128], index: 4, kind: output, shape index: {}]
  %s5 = sld [smem:[#allocation0]]
  $region53: #{tpu_custom_call.1} parent=0
    _
  %s7 = ssub.s32 1, %s5
  %s8 = scalar_select 0, %s7, %s5
  $region1: #{tpu_custom_call.1} parent=0
    #allocation2 [shape = 'u8[131072]{0}', space=vmem, size = 0x20000, scoped, tag = 'input window, operand 1']
    #allocation3 [shape = 's32[2]{0}', space=sflag, size = 0x8, scoped, tag = 'scoped memory for tpu_custom_call.1']
    #allocation4 [shape = 's32[2]{0}', space=sflag, size = 0x8, scoped, tag = 'scoped memory for tpu_custom_call.1']
    #allocation5 [shape = 'u8[131072]{0}', space=vmem, size = 0x20000, scoped, tag = 'output window, operand 0']
    %9 = vsyncpa [#allocation3], 0
    %s10 = scalar_lea.sflag [#allocation3], 1
    %11 = vsyncpa %s10, 0
    %12 = vsyncpa [#allocation4], 0
    %s13 = scalar_lea.sflag [#allocation4], 1
    %14 = vsyncpa %s13, 0
    loop: start=0, step=1, limit=4
    $region2: #{tpu_custom_call.1} parent=1 // loop_pre_header
      _
    $region3: #{tpu_custom_call.1} parent=1 // loop_header
      %s16 = sphi 0, %s20
      %p17 = scmp.ge.s32.totalorder %s16, 4
      %s23 = sphi 0, %s42
      %s24 = sphi 0, %s38
      %s25 = sphi 0, %s34
      %s26 = sphi 0, %s23
      %s27 = sphi 0, %s24
      %s28 = sphi 0, %s25
      %s29 = sphi 0, %s26
      %s30 = sphi 0, %s27
      %s31 = sphi 0, %s28
      %s47 = sphi 0, %s49
      %s50 = sphi 0, %s47
      %s51 = sphi 0, %s50
      %s67 = sphi 0, %s51
      %s75 = sphi 0, %s77
      %s78 = sphi 0, %s75
      %s79 = sphi 0, %s78
      %s95 = sphi 0, %s79
      %s103 = sphi 0, %s105
      %s106 = sphi 0, %s103
      %s107 = sphi 0, %s106
      %s123 = sphi 0, %s107
      %s131 = sphi 0, %s133
      %s134 = sphi 0, %s131
      %s135 = sphi 0, %s134
      %s151 = sphi 0, %s135
      %s161 = sphi 0, %s163
      %s164 = sphi 0, %s161
      %s165 = sphi 0, %s164
      %s181 = sphi 0, %s165
    $region4: #{tpu_custom_call.1} parent=1 // loop_header_branch
      %19 = sbr.rel (%p17) target = $region8
    $region5: #{tpu_custom_call.1} parent=1 // loop_body
      %s21 = ssub.s32 %s16, 1
      %s22 = ssub.s32 %s16, 2
      %s32 = sadd.s32 1, %s25
      %p33 = scmp.ge.s32.totalorder %s32, 1
      %s34 = scalar_select %p33, 0, %s32
      %s35 = sadd.s32 1, %s24
      %s36 = scalar_select %p33, %s35, %s24
      %p37 = scmp.ge.s32.totalorder %s36, 1
      %s38 = scalar_select %p37, 0, %s36
      %s39 = sadd.s32 1, %s23
      %s40 = scalar_select %p37, %s39, %s23
      %p41 = scmp.ge.s32.totalorder %s40, 2
      %s42 = scalar_select %p41, 0, %s40
      %s43 = ssub.s32 %s23, %s42
      %s44 = ssub.s32 %s24, %s38
      %s45 = sor.u32 %s43, %s44
      %p46 = scmp.eq.s32.totalorder %s45, 0
      %s48 = sadd.s32 %s47, 1
      %s49 = scalar_select %p46, %s47, %s48
      %p52 = pneg %p46
      %p53 = scmp.eq.s32.totalorder %s16, 1
      %p54 = por %p52, %p53
      %p55 = scmp.ne.s32.totalorder %s47, %s50
      %p56 = scmp.eq.s32.totalorder %s16, 0
      %p57 = por %p55, %p56
      %p58 = scmp.ne.s32.totalorder %s47, %s50
      %p59 = scmp.eq.s32.totalorder %s21, 1
      %p60 = por %p58, %p59
      %p61 = scmp.ne.s32.totalorder %s50, %s51
      %p62 = scmp.eq.s32.totalorder %s21, 0
      %p63 = por %p61, %p62
      %p64 = scmp.ne.s32.totalorder %s50, %s51
      %p65 = scmp.eq.s32.totalorder %s22, 1
      %p66 = por %p64, %p65
      %p68 = scmp.ne.s32.totalorder %s51, %s67
      %p69 = scmp.eq.s32.totalorder %s22, 0
      %p70 = por %p68, %p69
      %s71 = ssub.s32 %s23, %s42
      %s72 = ssub.s32 %s25, %s34
      %s73 = sor.u32 %s71, %s72
      %p74 = scmp.eq.s32.totalorder %s73, 0
      %s76 = sadd.s32 %s75, 1
      %s77 = scalar_select %p74, %s75, %s76
      %p80 = pneg %p74
      %p81 = scmp.eq.s32.totalorder %s16, 1
      %p82 = por %p80, %p81
      %p83 = scmp.ne.s32.totalorder %s75, %s78
      %p84 = scmp.eq.s32.totalorder %s16, 0
      %p85 = por %p83, %p84
      %p86 = scmp.ne.s32.totalorder %s75, %s78
      %p87 = scmp.eq.s32.totalorder %s21, 1
      %p88 = por %p86, %p87
      %p89 = scmp.ne.s32.totalorder %s78, %s79
      %p90 = scmp.eq.s32.totalorder %s21, 0
      %p91 = por %p89, %p90
      %p92 = scmp.ne.s32.totalorder %s78, %s79
      %p93 = scmp.eq.s32.totalorder %s22, 1
      %p94 = por %p92, %p93
      %p96 = scmp.ne.s32.totalorder %s79, %s95
      %p97 = scmp.eq.s32.totalorder %s22, 0
      %p98 = por %p96, %p97
      %s99 = ssub.s32 %s23, %s42
      %s100 = ssub.s32 %s24, %s38
      %s101 = sor.u32 %s99, %s100
      %p102 = scmp.eq.s32.totalorder %s101, 0
      %s104 = sadd.s32 %s103, 1
      %s105 = scalar_select %p102, %s103, %s104
      %p108 = pneg %p102
      %p109 = scmp.eq.s32.totalorder %s16, 1
      %p110 = por %p108, %p109
      %p111 = scmp.ne.s32.totalorder %s103, %s106
      %p112 = scmp.eq.s32.totalorder %s16, 0
      %p113 = por %p111, %p112
      %p114 = scmp.ne.s32.totalorder %s103, %s106
      %p115 = scmp.eq.s32.totalorder %s21, 1
      %p116 = por %p114, %p115
      %p117 = scmp.ne.s32.totalorder %s106, %s107
      %p118 = scmp.eq.s32.totalorder %s21, 0
      %p119 = por %p117, %p118
      %p120 = scmp.ne.s32.totalorder %s106, %s107
      %p121 = scmp.eq.s32.totalorder %s22, 1
      %p122 = por %p120, %p121
      %p124 = scmp.ne.s32.totalorder %s107, %s123
      %p125 = scmp.eq.s32.totalorder %s22, 0
      %p126 = por %p124, %p125
      %s127 = ssub.s32 %s23, %s42
      %s128 = ssub.s32 %s25, %s34
      %s129 = sor.u32 %s127, %s128
      %p130 = scmp.eq.s32.totalorder %s129, 0
      %s132 = sadd.s32 %s131, 1
      %s133 = scalar_select %p130, %s131, %s132
      %p136 = pneg %p130
      %p137 = scmp.eq.s32.totalorder %s16, 1
      %p138 = por %p136, %p137
      %p139 = scmp.ne.s32.totalorder %s131, %s134
      %p140 = scmp.eq.s32.totalorder %s16, 0
      %p141 = por %p139, %p140
      %p142 = scmp.ne.s32.totalorder %s131, %s134
      %p143 = scmp.eq.s32.totalorder %s21, 1
      %p144 = por %p142, %p143
      %p145 = scmp.ne.s32.totalorder %s134, %s135
      %p146 = scmp.eq.s32.totalorder %s21, 0
      %p147 = por %p145, %p146
      %p148 = scmp.ne.s32.totalorder %s134, %s135
      %p149 = scmp.eq.s32.totalorder %s22, 1
      %p150 = por %p148, %p149
      %p152 = scmp.ne.s32.totalorder %s135, %s151
      %p153 = scmp.eq.s32.totalorder %s22, 0
      %p154 = por %p152, %p153
      %s155 = ssub.s32 %s23, %s42
      %s156 = ssub.s32 %s24, %s38
      %s157 = sor.u32 %s155, %s156
      %s158 = ssub.s32 %s25, %s34
      %s159 = sor.u32 %s157, %s158
      %p160 = scmp.eq.s32.totalorder %s159, 0
      %s162 = sadd.s32 %s161, 1
      %s163 = scalar_select %p160, %s161, %s162
      %p166 = pneg %p160
      %p167 = scmp.eq.s32.totalorder %s16, 1
      %p168 = por %p166, %p167
      %p169 = scmp.ne.s32.totalorder %s161, %s164
      %p170 = scmp.eq.s32.totalorder %s16, 0
      %p171 = por %p169, %p170
      %p172 = scmp.ne.s32.totalorder %s161, %s164
      %p173 = scmp.eq.s32.totalorder %s21, 1
      %p174 = por %p172, %p173
      %p175 = scmp.ne.s32.totalorder %s164, %s165
      %p176 = scmp.eq.s32.totalorder %s21, 0
      %p177 = por %p175, %p176
      %p178 = scmp.ne.s32.totalorder %s164, %s165
      %p179 = scmp.eq.s32.totalorder %s22, 1
      %p180 = por %p178, %p179
      %p182 = scmp.ne.s32.totalorder %s165, %s181
      %p183 = scmp.eq.s32.totalorder %s22, 0
      %p184 = por %p182, %p183
      %p185 = scmp.le.s32.totalorder 1, %s16
      %p186 = scmp.lt.s32.totalorder %s16, 3
      %p187 = pnand %p185, %p186
      %p188 = pneg %p187
      // Predicated region
      $region9: #{tpu_custom_call.1} parent=5 // pred_check
        _
      $region10: #{tpu_custom_call.1} parent=5 // pred_check_branch
        %190 = sbr.rel (%p187) target = $region12
      $region11: #{tpu_custom_call.1} parent=5 // pred_region
        %s191 = ssub.s32 %s16, 1
      $region12: #{tpu_custom_call.1} parent=5 // pred_fallthru
        _
      %p192 = scmp.lt.s32.totalorder %s16, 2
      // Predicated region
      $region13: #{tpu_custom_call.1} parent=5 // pred_check
        %p193 = pneg %p192
      $region14: #{tpu_custom_call.1} parent=5 // pred_check_branch
        %195 = sbr.rel (%p193) target = $region16
      $region15: #{tpu_custom_call.1} parent=5 // pred_region
        // Predicated region
        $region17: #{tpu_custom_call.1} parent=15 // pred_check
          %p196 = pneg %p57
        $region18: #{tpu_custom_call.1} parent=15 // pred_check_branch
          %198 = sbr.rel (%p196) target = $region20
        $region19: #{tpu_custom_call.1} parent=15 // pred_region
          %s199 = smul.u32 16, %s24
          %p200 = scmp.lt.s32.totalorder %s23, 1
          %s201 = scalar_select %p200, %s23, 1
          %p202 = scmp.lt.s32.totalorder %s199, 15
          %s203 = scalar_select %p202, %s199, 15
          %s204 = smul.addr %s201, 16
          %s205 = sadd.s32 %s203, %s204
          %s206 = smul.addr %s205, 8
          %s207 = scalar_lea.vmem %s0, %s206
          %s208 = smul.u32 16, %s24
        $region20: #{tpu_custom_call.1} parent=15 // pred_fallthru
          _
        // Predicated region
        $region21: #{tpu_custom_call.1} parent=15 // pred_check
          %p209 = pneg %p85
        $region22: #{tpu_custom_call.1} parent=15 // pred_check_branch
          %211 = sbr.rel (%p209) target = $region24
        $region23: #{tpu_custom_call.1} parent=15 // pred_region
          %s212 = sand.u32 %s75, 1
          %s213 = scalar_lea.sflag [#allocation3], %s212
          %s214 = sand.u32 %s75, 1
          %s215 = smul.addr %s214, 128
          %s216 = scalar_lea.vmem [#allocation2], %s215
          %s217 = smul.u32 16, %s25
          %s219 = ssub.s32 2048, 2048
          %220 = vsyncadd %s213, %s219
          %s221 = smul.addr %s23, 16
          %s222 = sadd.s32 %s217, %s221
          %s223 = smul.addr %s222, 128
          %s224 = scalar_lea.hbm %s1, %s223
          %s225 = sshll.u32 %s216, 4
          %s226 = int_to_ptr.vmem [resolvable:$true] %s225
          %231 = dma.hbm_to_vmem [thread:$0]  %s224, 2048, %s226, %s213, 128, 128, 8
        $region24: #{tpu_custom_call.1} parent=15 // pred_fallthru
          _
        // Predicated region
        $region25: #{tpu_custom_call.1} parent=15 // pred_check
          %p232 = pneg %p113
        $region26: #{tpu_custom_call.1} parent=15 // pred_check_branch
          %234 = sbr.rel (%p232) target = $region28
        $region27: #{tpu_custom_call.1} parent=15 // pred_region
          %s235 = smul.u32 16, %s24
          %p236 = scmp.lt.s32.totalorder %s23, 1
          %s237 = scalar_select %p236, %s23, 1
          %p238 = scmp.lt.s32.totalorder %s235, 15
          %s239 = scalar_select %p238, %s235, 15
          %s240 = smul.addr %s237, 16
          %s241 = sadd.s32 %s239, %s240
          %s242 = smul.addr %s241, 8
          %s243 = scalar_lea.vmem %s2, %s242
          %s244 = smul.u32 16, %s24
        $region28: #{tpu_custom_call.1} parent=15 // pred_fallthru
          _
        // Predicated region
        $region29: #{tpu_custom_call.1} parent=15 // pred_check
          %p245 = pneg %p141
        $region30: #{tpu_custom_call.1} parent=15 // pred_check_branch
          %247 = sbr.rel (%p245) target = $region32
        $region31: #{tpu_custom_call.1} parent=15 // pred_region
          %p248 = scmp.lt.s32.totalorder %s23, 1
          %s249 = scalar_select %p248, %s23, 1
          %p250 = scmp.lt.s32.totalorder %s25, 0
          %s251 = scalar_select %p250, %s25, 0
          %s252 = sadd.s32 %s251, %s249
          %s253 = scalar_lea.vmem %s3, %s252
        $region32: #{tpu_custom_call.1} parent=15 // pred_fallthru
          _
      $region16: #{tpu_custom_call.1} parent=5 // pred_fallthru
        _
      %p254 = scmp.le.s32.totalorder 1, %s16
      %p255 = scmp.lt.s32.totalorder %s16, 3
      %p256 = pnand %p254, %p255
      %p257 = pneg %p256
      // Predicated region
      $region33: #{tpu_custom_call.1} parent=5 // pred_check
        _
      $region34: #{tpu_custom_call.1} parent=5 // pred_check_branch
        %259 = sbr.rel (%p256) target = $region36
      $region35: #{tpu_custom_call.1} parent=5 // pred_region
        %s260 = ssub.s32 %s16, 1
        %s261 = sand.u32 %s78, 1
        %s262 = scalar_lea.sflag [#allocation3], %s261
        %s263 = sand.u32 %s78, 1
        %s264 = smul.addr %s263, 128
        %s265 = scalar_lea.vmem [#allocation2], %s264
        // Predicated region
        $region37: #{tpu_custom_call.1} parent=35 // pred_check
          %p266 = pneg %p91
        $region38: #{tpu_custom_call.1} parent=35 // pred_check_branch
          %268 = sbr.rel (%p266) target = $region40
        $region39: #{tpu_custom_call.1} parent=35 // pred_region
          %269 = dma.done %s262, 2048
        $region40: #{tpu_custom_call.1} parent=35 // pred_fallthru
          _
        %s270 = smul.u32 16, %s27
        %p271 = scmp.lt.s32.totalorder %s26, 1
        %s272 = scalar_select %p271, %s26, 1
        %p273 = scmp.lt.s32.totalorder %s270, 15
        %s274 = scalar_select %p273, %s270, 15
        %s275 = smul.addr %s272, 16
        %s276 = sadd.s32 %s274, %s275
        %s277 = smul.addr %s276, 8
        %s278 = scalar_lea.vmem %s0, %s277
        %p279 = pneg %p63
        %p280 = pneg %p60
        %s281 = sand.u32 %s78, 1
        %s282 = scalar_lea.sflag [#allocation3], %s281
        %s283 = sand.u32 %s78, 1
        %s284 = smul.addr %s283, 128
        %s285 = scalar_lea.vmem [#allocation2], %s284
        %p286 = pneg %p91
        %p287 = pneg %p88
        %s288 = smul.u32 16, %s27
        %p289 = scmp.lt.s32.totalorder %s26, 1
        %s290 = scalar_select %p289, %s26, 1
        %p291 = scmp.lt.s32.totalorder %s288, 15
        %s292 = scalar_select %p291, %s288, 15
        %s293 = smul.addr %s290, 16
        %s294 = sadd.s32 %s292, %s293
        %s295 = smul.addr %s294, 8
        %s296 = scalar_lea.vmem %s2, %s295
        %p297 = pneg %p119
        %p298 = pneg %p116
        %p299 = scmp.lt.s32.totalorder %s26, 1
        %s300 = scalar_select %p299, %s26, 1
        %p301 = scmp.lt.s32.totalorder %s28, 0
        %s302 = scalar_select %p301, %s28, 0
        %s303 = sadd.s32 %s302, %s300
        %s304 = scalar_lea.vmem %s3, %s303
        %p305 = pneg %p147
        %p306 = pneg %p144
        %p307 = pneg %p177
        %p308 = pneg %p174
        %s309 = sand.u32 %s164, 1
        %s310 = scalar_lea.sflag [#allocation4], %s309
        %s311 = sand.u32 %s164, 1
        %s312 = smul.addr %s311, 128
        %s313 = scalar_lea.vmem [#allocation5], %s312
        %s314 = smul.u32 16, %s27
        %p315 = scmp.lt.s32.totalorder %s26, 1
        %s316 = scalar_select %p315, %s26, 1
        %p317 = scmp.lt.s32.totalorder %s314, 15
        %s318 = scalar_select %p317, %s314, 15
        %s319 = smul.addr %s316, 16
        %s320 = sadd.s32 %s318, %s319
        %s321 = smul.addr %s320, 8
        %s322 = scalar_lea.vmem %s0, %s321
        %s323 = smul.u32 16, %s27
        %s324 = smul.u32 16, %s28
        %s325 = smul.u32 16, %s27
        %p326 = scmp.lt.s32.totalorder %s26, 1
        %s327 = scalar_select %p326, %s26, 1
        %p328 = scmp.lt.s32.totalorder %s325, 15
        %s329 = scalar_select %p328, %s325, 15
        %s330 = smul.addr %s327, 16
        %s331 = sadd.s32 %s329, %s330
        %s332 = smul.addr %s331, 8
        %s333 = scalar_lea.vmem %s2, %s332
        %s334 = smul.u32 16, %s27
        %p335 = scmp.lt.s32.totalorder %s26, 1
        %s336 = scalar_select %p335, %s26, 1
        %p337 = scmp.lt.s32.totalorder %s28, 0
        %s338 = scalar_select %p337, %s28, 0
        %s339 = sadd.s32 %s338, %s336
        %s340 = scalar_lea.vmem %s3, %s339
        %s341 = smul.u32 16, %s27
        %v342 = vld [vmem:[%s322] sm:$0xff]
        %v343 = vld [vmem:[%s322 + $0x8] sm:$0xff]
        %v344 = vld [vmem:[%s322 + $0x10] sm:$0xff]
        %v345 = vld [vmem:[%s322 + $0x18] sm:$0xff]
        %v346 = vld [vmem:[%s322 + $0x20] sm:$0xff]
        %v347 = vld [vmem:[%s322 + $0x28] sm:$0xff]
        %v348 = vld [vmem:[%s322 + $0x30] sm:$0xff]
        %v349 = vld [vmem:[%s322 + $0x38] sm:$0xff]
        %v350 = vld [vmem:[%s322 + $0x40] sm:$0xff]
        %v351 = vld [vmem:[%s322 + $0x48] sm:$0xff]
        %v352 = vld [vmem:[%s322 + $0x50] sm:$0xff]
        %v353 = vld [vmem:[%s322 + $0x58] sm:$0xff]
        %v354 = vld [vmem:[%s322 + $0x60] sm:$0xff]
        %v355 = vld [vmem:[%s322 + $0x68] sm:$0xff]
        %v356 = vld [vmem:[%s322 + $0x70] sm:$0xff]
        %v357 = vld [vmem:[%s322 + $0x78] sm:$0xff]
        %v358 = vld [vmem:[%s265] sm:$0xff]
        %v359 = vld [vmem:[%s265 + $0x8] sm:$0xff]
        %v360 = vld [vmem:[%s265 + $0x10] sm:$0xff]
        %v361 = vld [vmem:[%s265 + $0x18] sm:$0xff]
        %v362 = vld [vmem:[%s265 + $0x20] sm:$0xff]
        %v363 = vld [vmem:[%s265 + $0x28] sm:$0xff]
        %v364 = vld [vmem:[%s265 + $0x30] sm:$0xff]
        %v365 = vld [vmem:[%s265 + $0x38] sm:$0xff]
        %v366 = vld [vmem:[%s265 + $0x40] sm:$0xff]
        %v367 = vld [vmem:[%s265 + $0x48] sm:$0xff]
        %v368 = vld [vmem:[%s265 + $0x50] sm:$0xff]
        %v369 = vld [vmem:[%s265 + $0x58] sm:$0xff]
        %v370 = vld [vmem:[%s265 + $0x60] sm:$0xff]
        %v371 = vld [vmem:[%s265 + $0x68] sm:$0xff]
        %v372 = vld [vmem:[%s265 + $0x70] sm:$0xff]
        %v373 = vld [vmem:[%s265 + $0x78] sm:$0xff]
        %374 = vmatprep.subr.mxu0 0.0
        %375 = vmatpush1.xpose.msra.mxu0 %v358
        %376 = vmatprep.subr.mxu0 0.0
        %377 = vmatpush1.xpose.msra.mxu0 %v359
        %378 = vmatprep.subr.mxu0 0.0
        %379 = vmatpush1.xpose.msra.mxu0 %v360
        %380 = vmatprep.subr.mxu0 0.0
        %381 = vmatpush1.xpose.msra.mxu0 %v361
        %382 = vmatprep.subr.mxu0 0.0
        %383 = vmatpush1.xpose.msra.mxu0 %v362
        %384 = vmatprep.subr.mxu0 0.0
        %385 = vmatpush1.xpose.msra.mxu0 %v363
        %386 = vmatprep.subr.mxu0 0.0
        %387 = vmatpush1.xpose.msra.mxu0 %v364
        %388 = vmatprep.subr.mxu0 0.0
        %389 = vmatpush1.xpose.msra.mxu0 %v365
        %390 = vmatprep.subr.mxu0 0.0
        %391 = vmatpush1.xpose.msra.mxu0 %v366
        %392 = vmatprep.subr.mxu0 0.0
        %393 = vmatpush1.xpose.msra.mxu0 %v367
        %394 = vmatprep.subr.mxu0 0.0
        %395 = vmatpush1.xpose.msra.mxu0 %v368
        %396 = vmatprep.subr.mxu0 0.0
        %397 = vmatpush1.xpose.msra.mxu0 %v369
        %398 = vmatprep.subr.mxu0 0.0
        %399 = vmatpush1.xpose.msra.mxu0 %v370
        %400 = vmatprep.subr.mxu0 0.0
        %401 = vmatpush1.xpose.msra.mxu0 %v371
        %402 = vmatprep.subr.mxu0 0.0
        %403 = vmatpush1.xpose.msra.mxu0 %v372
        %404 = vmatprep.subr.mxu0 0.0
        %405 = vmatpush1.xpose.msra.mxu0 %v373
        %406 = vmatprep.subr.mxu0 0.0
        %407 = vmatpush1.xpose.msra.mxu0 0.0
        %408 = vmatprep.subr.mxu0 0.0
        %409 = vmatpush1.xpose.msra.mxu0 0.0
        %410 = vmatprep.subr.mxu0 0.0
        %411 = vmatpush1.xpose.msra.mxu0 0.0
        %412 = vmatprep.subr.mxu0 0.0
        %413 = vmatpush1.xpose.msra.mxu0 0.0
        %414 = vmatprep.subr.mxu0 0.0
        %415 = vmatpush1.xpose.msra.mxu0 0.0
        %416 = vmatprep.subr.mxu0 0.0
        %417 = vmatpush1.xpose.msra.mxu0 0.0
        %418 = vmatprep.subr.mxu0 0.0
        %419 = vmatpush1.xpose.msra.mxu0 0.0
        %420 = vmatprep.subr.mxu0 0.0
        %421 = vmatpush1.xpose.msra.mxu0 0.0
        %422 = vmatprep.subr.mxu0 0.0
        %423 = vmatpush1.xpose.msra.mxu0 0.0
        %424 = vmatprep.subr.mxu0 0.0
        %425 = vmatpush1.xpose.msra.mxu0 0.0
        %426 = vmatprep.subr.mxu0 0.0
        %427 = vmatpush1.xpose.msra.mxu0 0.0
        %428 = vmatprep.subr.mxu0 0.0
        %429 = vmatpush1.xpose.msra.mxu0 0.0
        %430 = vmatprep.subr.mxu0 0.0
        %431 = vmatpush1.xpose.msra.mxu0 0.0
        %432 = vmatprep.subr.mxu0 0.0
        %433 = vmatpush1.xpose.msra.mxu0 0.0
        %434 = vmatprep.subr.mxu0 0.0
        %435 = vmatpush1.xpose.msra.mxu0 0.0
        %436 = vmatprep.subr.mxu0 0.0
        %437 = vmatpush1.xpose.msra.mxu0 0.0
        %438 = vmatprep.mubr.f32.mxu0 0.0
        %439 = vmatmul.mubr.f32.gmra.mrb[0].mxu0 %v342
        %v440 = vpop.f32.mrb[0].mxu0
        %v441 = vadd.f32 0.0, %v440
        %v442 = vpop.f32.mrb[0].mxu0
        %443 = vmatprep.mubr.f32.mxu0 0.0
        %444 = vmatmul.mubr.f32.gmra.mrb[0].mxu0 %v343
        %v445 = vpop.f32.mrb[0].mxu0
        %v446 = vadd.f32 0.0, %v445
        %v447 = vpop.f32.mrb[0].mxu0
        %448 = vmatprep.mubr.f32.mxu0 0.0
        %449 = vmatmul.mubr.f32.gmra.mrb[0].mxu0 %v344
        %v450 = vpop.f32.mrb[0].mxu0
        %v451 = vadd.f32 0.0, %v450
        %v452 = vpop.f32.mrb[0].mxu0
        %453 = vmatprep.mubr.f32.mxu0 0.0
        %454 = vmatmul.mubr.f32.gmra.mrb[0].mxu0 %v345
        %v455 = vpop.f32.mrb[0].mxu0
        %v456 = vadd.f32 0.0, %v455
        %v457 = vpop.f32.mrb[0].mxu0
        %458 = vmatprep.mubr.f32.mxu0 0.0
        %459 = vmatmul.mubr.f32.gmra.mrb[0].mxu0 %v346
        %v460 = vpop.f32.mrb[0].mxu0
        %v461 = vadd.f32 0.0, %v460
        %v462 = vpop.f32.mrb[0].mxu0
        %463 = vmatprep.mubr.f32.mxu0 0.0
        %464 = vmatmul.mubr.f32.gmra.mrb[0].mxu0 %v347
        %v465 = vpop.f32.mrb[0].mxu0
        %v466 = vadd.f32 0.0, %v465
        %v467 = vpop.f32.mrb[0].mxu0
        %468 = vmatprep.mubr.f32.mxu0 0.0
        %469 = vmatmul.mubr.f32.gmra.mrb[0].mxu0 %v348
        %v470 = vpop.f32.mrb[0].mxu0
        %v471 = vadd.f32 0.0, %v470
        %v472 = vpop.f32.mrb[0].mxu0
        %473 = vmatprep.mubr.f32.mxu0 0.0
        %474 = vmatmul.mubr.f32.gmra.mrb[0].mxu0 %v349
        %v475 = vpop.f32.mrb[0].mxu0
        %v476 = vadd.f32 0.0, %v475
        %v477 = vpop.f32.mrb[0].mxu0
        %478 = vmatprep.mubr.f32.mxu0 0.0
        %479 = vmatmul.mubr.f32.gmra.mrb[0].mxu0 %v350
        %v480 = vpop.f32.mrb[0].mxu0
        %v481 = vadd.f32 0.0, %v480
        %v482 = vpop.f32.mrb[0].mxu0
        %483 = vmatprep.mubr.f32.mxu0 0.0
        %484 = vmatmul.mubr.f32.gmra.mrb[0].mxu0 %v351
        %v485 = vpop.f32.mrb[0].mxu0
        %v486 = vadd.f32 0.0, %v485
        %v487 = vpop.f32.mrb[0].mxu0
        %488 = vmatprep.mubr.f32.mxu0 0.0
        %489 = vmatmul.mubr.f32.gmra.mrb[0].mxu0 %v352
        %v490 = vpop.f32.mrb[0].mxu0
        %v491 = vadd.f32 0.0, %v490
        %v492 = vpop.f32.mrb[0].mxu0
        %493 = vmatprep.mubr.f32.mxu0 0.0
        %494 = vmatmul.mubr.f32.gmra.mrb[0].mxu0 %v353
        %v495 = vpop.f32.mrb[0].mxu0
        %v496 = vadd.f32 0.0, %v495
        %v497 = vpop.f32.mrb[0].mxu0
        %498 = vmatprep.mubr.f32.mxu0 0.0
        %499 = vmatmul.mubr.f32.gmra.mrb[0].mxu0 %v354
        %v500 = vpop.f32.mrb[0].mxu0
        %v501 = vadd.f32 0.0, %v500
        %v502 = vpop.f32.mrb[0].mxu0
        %503 = vmatprep.mubr.f32.mxu0 0.0
        %504 = vmatmul.mubr.f32.gmra.mrb[0].mxu0 %v355
        %v505 = vpop.f32.mrb[0].mxu0
        %v506 = vadd.f32 0.0, %v505
        %v507 = vpop.f32.mrb[0].mxu0
        %508 = vmatprep.mubr.f32.mxu0 0.0
        %509 = vmatmul.mubr.f32.gmra.mrb[0].mxu0 %v356
        %v510 = vpop.f32.mrb[0].mxu0
        %v511 = vadd.f32 0.0, %v510
        %v512 = vpop.f32.mrb[0].mxu0
        %513 = vmatprep.mubr.f32.mxu0 0.0
        %514 = vmatmul.mubr.f32.gmra.mrb[0].mxu0 %v357
        %v515 = vpop.f32.mrb[0].mxu0
        %v516 = vadd.f32 0.0, %v515
        %v517 = vpop.f32.mrb[0].mxu0
        %518 = vdwg.mxu0
        %v519 = vld [vmem:[%s333] sm:$0xff]
        %v520 = vld [vmem:[%s333 + $0x8] sm:$0xff]
        %v521 = vld [vmem:[%s333 + $0x10] sm:$0xff]
        %v522 = vld [vmem:[%s333 + $0x18] sm:$0xff]
        %v523 = vld [vmem:[%s333 + $0x20] sm:$0xff]
        %v524 = vld [vmem:[%s333 + $0x28] sm:$0xff]
        %v525 = vld [vmem:[%s333 + $0x30] sm:$0xff]
        %v526 = vld [vmem:[%s333 + $0x38] sm:$0xff]
        %v527 = vld [vmem:[%s333 + $0x40] sm:$0xff]
        %v528 = vld [vmem:[%s333 + $0x48] sm:$0xff]
        %v529 = vld [vmem:[%s333 + $0x50] sm:$0xff]
        %v530 = vld [vmem:[%s333 + $0x58] sm:$0xff]
        %v531 = vld [vmem:[%s333 + $0x60] sm:$0xff]
        %v532 = vld [vmem:[%s333 + $0x68] sm:$0xff]
        %v533 = vld [vmem:[%s333 + $0x70] sm:$0xff]
        %v534 = vld [vmem:[%s333 + $0x78] sm:$0xff]
        %v535 = vld [vmem:[%s340] sm:$0x1]
        %537 = vset.pattern.permute.xlu0 0
        %538 = vperm.xlu0 %537, %v519
        %v539 = vpop.permute.xlu0 %538
        %542 = vset.pattern.permute.xlu0 0
        %543 = vperm.xlu0 %542, %v520
        %v544 = vpop.permute.xlu0 %543
        %547 = vset.pattern.permute.xlu0 0
        %548 = vperm.xlu0 %547, %v521
        %v549 = vpop.permute.xlu0 %548
        %552 = vset.pattern.permute.xlu0 0
        %553 = vperm.xlu0 %552, %v522
        %v554 = vpop.permute.xlu0 %553
        %557 = vset.pattern.permute.xlu0 0
        %558 = vperm.xlu0 %557, %v523
        %v559 = vpop.permute.xlu0 %558
        %562 = vset.pattern.permute.xlu0 0
        %563 = vperm.xlu0 %562, %v524
        %v564 = vpop.permute.xlu0 %563
        %567 = vset.pattern.permute.xlu0 0
        %568 = vperm.xlu0 %567, %v525
        %v569 = vpop.permute.xlu0 %568
        %572 = vset.pattern.permute.xlu0 0
        %573 = vperm.xlu0 %572, %v526
        %v574 = vpop.permute.xlu0 %573
        %577 = vset.pattern.permute.xlu0 0
        %578 = vperm.xlu0 %577, %v527
        %v579 = vpop.permute.xlu0 %578
        %582 = vset.pattern.permute.xlu0 0
        %583 = vperm.xlu0 %582, %v528
        %v584 = vpop.permute.xlu0 %583
        %587 = vset.pattern.permute.xlu0 0
        %588 = vperm.xlu0 %587, %v529
        %v589 = vpop.permute.xlu0 %588
        %592 = vset.pattern.permute.xlu0 0
        %593 = vperm.xlu0 %592, %v530
        %v594 = vpop.permute.xlu0 %593
        %597 = vset.pattern.permute.xlu0 0
        %598 = vperm.xlu0 %597, %v531
        %v599 = vpop.permute.xlu0 %598
        %602 = vset.pattern.permute.xlu0 0
        %603 = vperm.xlu0 %602, %v532
        %v604 = vpop.permute.xlu0 %603
        %607 = vset.pattern.permute.xlu0 0
        %608 = vperm.xlu0 %607, %v533
        %v609 = vpop.permute.xlu0 %608
        %612 = vset.pattern.permute.xlu0 0
        %613 = vperm.xlu0 %612, %v534
        %v614 = vpop.permute.xlu0 %613
        %v617 = vlaneseq
        %v618 = vshrl.u32 %v617, 7
        %v619 = vsub.s32 0, %v618
        %v620 = vrot.slane %v535, %v619
        %v622 = vadd.f32 %v539, %v620
        %v623 = vadd.f32 %v544, %v620
        %v624 = vadd.f32 %v549, %v620
        %v625 = vadd.f32 %v554, %v620
        %v626 = vadd.f32 %v559, %v620
        %v627 = vadd.f32 %v564, %v620
        %v628 = vadd.f32 %v569, %v620
        %v629 = vadd.f32 %v574, %v620
        %v630 = vadd.f32 %v579, %v620
        %v631 = vadd.f32 %v584, %v620
        %v632 = vadd.f32 %v589, %v620
        %v633 = vadd.f32 %v594, %v620
        %v634 = vadd.f32 %v599, %v620
        %v635 = vadd.f32 %v604, %v620
        %v636 = vadd.f32 %v609, %v620
        %v637 = vadd.f32 %v614, %v620
        %v638 = vmul.f32 %v441, 2.0
        %v639 = vmul.f32 %v446, 2.0
        %v640 = vmul.f32 %v451, 2.0
        %v641 = vmul.f32 %v456, 2.0
        %v642 = vmul.f32 %v461, 2.0
        %v643 = vmul.f32 %v466, 2.0
        %v644 = vmul.f32 %v471, 2.0
        %v645 = vmul.f32 %v476, 2.0
        %v646 = vmul.f32 %v481, 2.0
        %v647 = vmul.f32 %v486, 2.0
        %v648 = vmul.f32 %v491, 2.0
        %v649 = vmul.f32 %v496, 2.0
        %v650 = vmul.f32 %v501, 2.0
        %v651 = vmul.f32 %v506, 2.0
        %v652 = vmul.f32 %v511, 2.0
        %v653 = vmul.f32 %v516, 2.0
        %v654 = vsub.f32 %v622, %v638
        %v655 = vsub.f32 %v623, %v639
        %v656 = vsub.f32 %v624, %v640
        %v657 = vsub.f32 %v625, %v641
        %v658 = vsub.f32 %v626, %v642
        %v659 = vsub.f32 %v627, %v643
        %v660 = vsub.f32 %v628, %v644
        %v661 = vsub.f32 %v629, %v645
        %v662 = vsub.f32 %v630, %v646
        %v663 = vsub.f32 %v631, %v647
        %v664 = vsub.f32 %v632, %v648
        %v665 = vsub.f32 %v633, %v649
        %v666 = vsub.f32 %v634, %v650
        %v667 = vsub.f32 %v635, %v651
        %v668 = vsub.f32 %v636, %v652
        %v669 = vsub.f32 %v637, %v653
        %v670 = vmax.f32 %v654, 0.0
        %v671 = vmax.f32 %v655, 0.0
        %v672 = vmax.f32 %v656, 0.0
        %v673 = vmax.f32 %v657, 0.0
        %v674 = vmax.f32 %v658, 0.0
        %v675 = vmax.f32 %v659, 0.0
        %v676 = vmax.f32 %v660, 0.0
        %v677 = vmax.f32 %v661, 0.0
        %v678 = vmax.f32 %v662, 0.0
        %v679 = vmax.f32 %v663, 0.0
        %v680 = vmax.f32 %v664, 0.0
        %v681 = vmax.f32 %v665, 0.0
        %v682 = vmax.f32 %v666, 0.0
        %v683 = vmax.f32 %v667, 0.0
        %v684 = vmax.f32 %v668, 0.0
        %v685 = vmax.f32 %v669, 0.0
        %v686 = vrsqrt.pop %v670
        %v687 = vmul.f32 %v670, %v686
        %vm688 = vcmp.eq.f32.partialorder %v670, inf
        %v689 = vsel %vm688, %v670, %v687
        %vm690 = vcmp.eq.f32.partialorder %v670, 0.0
        %v691 = vand.u32 %v670, 2147483648
        %v692 = vsel %vm690, %v691, %v689
        %v693 = vrsqrt.pop %v671
        %v694 = vmul.f32 %v671, %v693
        %vm695 = vcmp.eq.f32.partialorder %v671, inf
        %v696 = vsel %vm695, %v671, %v694
        %vm697 = vcmp.eq.f32.partialorder %v671, 0.0
        %v698 = vand.u32 %v671, 2147483648
        %v699 = vsel %vm697, %v698, %v696
        %v700 = vrsqrt.pop %v672
        %v701 = vmul.f32 %v672, %v700
        %vm702 = vcmp.eq.f32.partialorder %v672, inf
        %v703 = vsel %vm702, %v672, %v701
        %vm704 = vcmp.eq.f32.partialorder %v672, 0.0
        %v705 = vand.u32 %v672, 2147483648
        %v706 = vsel %vm704, %v705, %v703
        %v707 = vrsqrt.pop %v673
        %v708 = vmul.f32 %v673, %v707
        %vm709 = vcmp.eq.f32.partialorder %v673, inf
        %v710 = vsel %vm709, %v673, %v708
        %vm711 = vcmp.eq.f32.partialorder %v673, 0.0
        %v712 = vand.u32 %v673, 2147483648
        %v713 = vsel %vm711, %v712, %v710
        %v714 = vrsqrt.pop %v674
        %v715 = vmul.f32 %v674, %v714
        %vm716 = vcmp.eq.f32.partialorder %v674, inf
        %v717 = vsel %vm716, %v674, %v715
        %vm718 = vcmp.eq.f32.partialorder %v674, 0.0
        %v719 = vand.u32 %v674, 2147483648
        %v720 = vsel %vm718, %v719, %v717
        %v721 = vrsqrt.pop %v675
        %v722 = vmul.f32 %v675, %v721
        %vm723 = vcmp.eq.f32.partialorder %v675, inf
        %v724 = vsel %vm723, %v675, %v722
        %vm725 = vcmp.eq.f32.partialorder %v675, 0.0
        %v726 = vand.u32 %v675, 2147483648
        %v727 = vsel %vm725, %v726, %v724
        %v728 = vrsqrt.pop %v676
        %v729 = vmul.f32 %v676, %v728
        %vm730 = vcmp.eq.f32.partialorder %v676, inf
        %v731 = vsel %vm730, %v676, %v729
        %vm732 = vcmp.eq.f32.partialorder %v676, 0.0
        %v733 = vand.u32 %v676, 2147483648
        %v734 = vsel %vm732, %v733, %v731
        %v735 = vrsqrt.pop %v677
        %v736 = vmul.f32 %v677, %v735
        %vm737 = vcmp.eq.f32.partialorder %v677, inf
        %v738 = vsel %vm737, %v677, %v736
        %vm739 = vcmp.eq.f32.partialorder %v677, 0.0
        %v740 = vand.u32 %v677, 2147483648
        %v741 = vsel %vm739, %v740, %v738
        %v742 = vrsqrt.pop %v678
        %v743 = vmul.f32 %v678, %v742
        %vm744 = vcmp.eq.f32.partialorder %v678, inf
        %v745 = vsel %vm744, %v678, %v743
        %vm746 = vcmp.eq.f32.partialorder %v678, 0.0
        %v747 = vand.u32 %v678, 2147483648
        %v748 = vsel %vm746, %v747, %v745
        %v749 = vrsqrt.pop %v679
        %v750 = vmul.f32 %v679, %v749
        %vm751 = vcmp.eq.f32.partialorder %v679, inf
        %v752 = vsel %vm751, %v679, %v750
        %vm753 = vcmp.eq.f32.partialorder %v679, 0.0
        %v754 = vand.u32 %v679, 2147483648
        %v755 = vsel %vm753, %v754, %v752
        %v756 = vrsqrt.pop %v680
        %v757 = vmul.f32 %v680, %v756
        %vm758 = vcmp.eq.f32.partialorder %v680, inf
        %v759 = vsel %vm758, %v680, %v757
        %vm760 = vcmp.eq.f32.partialorder %v680, 0.0
        %v761 = vand.u32 %v680, 2147483648
        %v762 = vsel %vm760, %v761, %v759
        %v763 = vrsqrt.pop %v681
        %v764 = vmul.f32 %v681, %v763
        %vm765 = vcmp.eq.f32.partialorder %v681, inf
        %v766 = vsel %vm765, %v681, %v764
        %vm767 = vcmp.eq.f32.partialorder %v681, 0.0
        %v768 = vand.u32 %v681, 2147483648
        %v769 = vsel %vm767, %v768, %v766
        %v770 = vrsqrt.pop %v682
        %v771 = vmul.f32 %v682, %v770
        %vm772 = vcmp.eq.f32.partialorder %v682, inf
        %v773 = vsel %vm772, %v682, %v771
        %vm774 = vcmp.eq.f32.partialorder %v682, 0.0
        %v775 = vand.u32 %v682, 2147483648
        %v776 = vsel %vm774, %v775, %v773
        %v777 = vrsqrt.pop %v683
        %v778 = vmul.f32 %v683, %v777
        %vm779 = vcmp.eq.f32.partialorder %v683, inf
        %v780 = vsel %vm779, %v683, %v778
        %vm781 = vcmp.eq.f32.partialorder %v683, 0.0
        %v782 = vand.u32 %v683, 2147483648
        %v783 = vsel %vm781, %v782, %v780
        %v784 = vrsqrt.pop %v684
        %v785 = vmul.f32 %v684, %v784
        %vm786 = vcmp.eq.f32.partialorder %v684, inf
        %v787 = vsel %vm786, %v684, %v785
        %vm788 = vcmp.eq.f32.partialorder %v684, 0.0
        %v789 = vand.u32 %v684, 2147483648
        %v790 = vsel %vm788, %v789, %v787
        %v791 = vrsqrt.pop %v685
        %v792 = vmul.f32 %v685, %v791
        %vm793 = vcmp.eq.f32.partialorder %v685, inf
        %v794 = vsel %vm793, %v685, %v792
        %vm795 = vcmp.eq.f32.partialorder %v685, 0.0
        %v796 = vand.u32 %v685, 2147483648
        %v797 = vsel %vm795, %v796, %v794
        %798 = vst [vmem:[%s313] sm:$0xff] %v692
        %799 = vst [vmem:[%s313 + $0x8] sm:$0xff] %v699
        %800 = vst [vmem:[%s313 + $0x10] sm:$0xff] %v706
        %801 = vst [vmem:[%s313 + $0x18] sm:$0xff] %v713
        %802 = vst [vmem:[%s313 + $0x20] sm:$0xff] %v720
        %803 = vst [vmem:[%s313 + $0x28] sm:$0xff] %v727
        %804 = vst [vmem:[%s313 + $0x30] sm:$0xff] %v734
        %805 = vst [vmem:[%s313 + $0x38] sm:$0xff] %v741
        %806 = vst [vmem:[%s313 + $0x40] sm:$0xff] %v748
        %807 = vst [vmem:[%s313 + $0x48] sm:$0xff] %v755
        %808 = vst [vmem:[%s313 + $0x50] sm:$0xff] %v762
        %809 = vst [vmem:[%s313 + $0x58] sm:$0xff] %v769
        %810 = vst [vmem:[%s313 + $0x60] sm:$0xff] %v776
        %811 = vst [vmem:[%s313 + $0x68] sm:$0xff] %v783
        %812 = vst [vmem:[%s313 + $0x70] sm:$0xff] %v790
        %813 = vst [vmem:[%s313 + $0x78] sm:$0xff] %v797
        %s814 = sand.u32 %s164, 1
        %s815 = scalar_lea.sflag [#allocation4], %s814
        %s816 = sand.u32 %s164, 1
        %s817 = smul.addr %s816, 128
        %s818 = scalar_lea.vmem [#allocation5], %s817
        // Predicated region
        $region41: #{tpu_custom_call.1} parent=35 // pred_check
          %p819 = pneg %p174
        $region42: #{tpu_custom_call.1} parent=35 // pred_check_branch
          %821 = sbr.rel (%p819) target = $region44
        $region43: #{tpu_custom_call.1} parent=35 // pred_region
          %s822 = smul.u32 16, %s27
          %s824 = ssub.s32 2048, 2048
          %825 = vsyncadd %s815, %s824
          %s826 = sadd.s32 %s28, %s822
          %s827 = smul.addr %s26, 16
          %s828 = sadd.s32 %s826, %s827
          %s829 = smul.addr %s828, 128
          %s830 = scalar_lea.hbm %s4, %s829
          %s831 = sshll.u32 %s818, 4
          %s832 = int_to_ptr.vmem [resolvable:$true] %s831
          %837 = dma.vmem_to_hbm [thread:$0]  %s832, 2048, %s830, %s815, 128, 128, 8
        $region44: #{tpu_custom_call.1} parent=35 // pred_fallthru
          _
      $region36: #{tpu_custom_call.1} parent=5 // pred_fallthru
        _
      %p838 = scmp.le.s32.totalorder 2, %s16
      // Predicated region
      $region45: #{tpu_custom_call.1} parent=5 // pred_check
        %p839 = pneg %p838
      $region46: #{tpu_custom_call.1} parent=5 // pred_check_branch
        %841 = sbr.rel (%p839) target = $region48
      $region47: #{tpu_custom_call.1} parent=5 // pred_region
        %s842 = ssub.s32 %s16, 2
        // Predicated region
        $region49: #{tpu_custom_call.1} parent=47 // pred_check
          %p843 = pneg %p180
        $region50: #{tpu_custom_call.1} parent=47 // pred_check_branch
          %845 = sbr.rel (%p843) target = $region52
        $region51: #{tpu_custom_call.1} parent=47 // pred_region
          %s846 = sand.u32 %s165, 1
          %s847 = scalar_lea.sflag [#allocation4], %s846
          %s848 = sand.u32 %s165, 1
          %s849 = smul.addr %s848, 128
          %s850 = scalar_lea.vmem [#allocation5], %s849
          %851 = dma.done %s847, 2048
        $region52: #{tpu_custom_call.1} parent=47 // pred_fallthru
          _
      $region48: #{tpu_custom_call.1} parent=5 // pred_fallthru
        _
    $region6: #{tpu_custom_call.1} parent=1 // loop_footer
      %s20 = sadd.s32 1, %s16
    $region7: #{tpu_custom_call.1} parent=1 // loop_footer_branch
      %15 = sbr.rel target = $region3
    $region8: #{tpu_custom_call.1} parent=1 // loop_exit
      _
    %852 = vsyncpa [#allocation3], 1
    %s853 = scalar_lea.sflag [#allocation3], 1
    %854 = vsyncpa %s853, 1
    %855 = vsyncpa [#allocation4], 1
    %s856 = scalar_lea.sflag [#allocation4], 1
    %857 = vsyncpa %s856, 1

</llo_original>
